<compile_context>
chip_gen: v7x
topology: tpu7x:2x2x1
jax: 0.10.0
libtpu: 0.0.40
codegen_flags: <defaults>
</compile_context>

<pallas_src>
import jax
import jax.numpy as jnp
from jax.experimental import pallas as pl
from jax.experimental.pallas import tpu as pltpu


def critic_kernel(state_ref, action_ref,
                  gamma_ref, beta_ref,
                  w1_ref, b1_ref,
                  w2s_ref, w2a_ref, b2_ref,
                  w3_ref, b3_ref,
                  w4_ref, b4_ref,
                  out_ref):
    s = state_ref[...]                                  # (B, S) f32
    inv_b = jnp.float32(1.0 / s.shape[0])

    # ---- BatchNorm1d (training-mode batch stats), single-pass statistics ----
    # var = E[x^2] - E[x]^2 ; fold gamma * rsqrt(var + eps) into one scale.
    mean = jnp.sum(s, axis=0, keepdims=True) * inv_b
    mean_sq = jnp.sum(s * s, axis=0, keepdims=True) * inv_b
    var = mean_sq - mean * mean
    scale = gamma_ref[...] * jax.lax.rsqrt(var + 1e-5)
    shift = beta_ref[...] - mean * scale
    s_bn = s * scale + shift

    # ---- fcs1 + ReLU (MXU) ----
    xs = jnp.dot(s_bn, w1_ref[...], preferred_element_type=jnp.float32) + b1_ref[...]
    xs = jnp.maximum(xs, 0.0)

    # ---- fc2: state half on the MXU; action half (tiny K) as unrolled VPU MACs
    x = jnp.dot(xs, w2s_ref[...], preferred_element_type=jnp.float32) + b2_ref[...]
    a = action_ref[...]                                 # (B, A) f32
    for k in range(a.shape[1]):                         # A is small & static
        x = x + a[:, k:k + 1] * w2a_ref[k:k + 1, :]
    x = jnp.maximum(x, 0.0)

    # ---- fc3 + ReLU (MXU) ----
    x = jnp.dot(x, w3_ref[...], preferred_element_type=jnp.float32) + b3_ref[...]
    x = jnp.maximum(x, 0.0)

    # ---- fc4 head (N=1): VPU broadcast-mul + lane reduce, lane-dense store ----
    q = jnp.sum(x * w4_ref[...], axis=-1, keepdims=True)        # (B, 1)
    out_ref[...] = q.T + b4_ref[...]                            # (1, B)


def critic_forward(state, action, params):
    """Returns Q-values with shape (B, 1), matching the PyTorch module."""
    B = state.shape[0]
    vmem = pl.BlockSpec(memory_space=pltpu.MemorySpace.VMEM)
    args = (state, action,
            params["bn_gamma"], params["bn_beta"],
            params["w1"], params["b1"],
            params["w2s"], params["w2a"], params["b2"],
            params["w3"], params["b3"],
            params["w4"], params["b4"])
    q_t = pl.pallas_call(
        critic_kernel,
        out_shape=jax.ShapeDtypeStruct((1, B), jnp.float32),  # lane-dense output
        in_specs=[vmem] * len(args),
        out_specs=vmem,
    )(*args)
    return q_t.T                                      # (B, 1) to match PyTorch API


def init_params(key, state_size, action_size,
                fcs1_units=128, fc2_units=64, fc3_units=32):
    """Deterministic synthetic init mirroring the PyTorch module's shapes.
    hidden_init uses lim = 1/sqrt(weight.size(0)) = 1/sqrt(out_features)."""
    ks = jax.random.split(key, 8)

    def u(k, shape, lim):
        return jax.random.uniform(k, shape, jnp.float32, -lim, lim)

    lim1 = 1.0 / jnp.sqrt(fcs1_units)
    lim2 = 1.0 / jnp.sqrt(fc2_units)
    lim3 = 1.0 / jnp.sqrt(fc3_units)
    in2 = fcs1_units + action_size

    w2_full = u(ks[1], (in2, fc2_units), lim2)          # (in, out) layout
    params = {
        # BatchNorm1d affine params (PyTorch default init: gamma=1, beta=0)
        "bn_gamma": jnp.ones((1, state_size), jnp.float32),
        "bn_beta": jnp.zeros((1, state_size), jnp.float32),
        # fcs1
        "w1": u(ks[0], (state_size, fcs1_units), lim1),
        "b1": u(ks[4], (1, fcs1_units), 1.0 / jnp.sqrt(state_size)),
        # fc2, split into the state-path and action-path halves of the concat
        "w2s": w2_full[:fcs1_units, :],
        "w2a": w2_full[fcs1_units:, :],
        "b2": u(ks[5], (1, fc2_units), 1.0 / jnp.sqrt(in2)),
        # fc3
        "w3": u(ks[2], (fc2_units, fc3_units), lim3),
        "b3": u(ks[6], (1, fc3_units), 1.0 / jnp.sqrt(fc2_units)),
        # fc4, kept as a (1, fc3_units) row for the VPU head
        "w4": u(ks[3], (1, fc3_units), 0.003),
        "b4": u(ks[7], (1, 1), 1.0 / jnp.sqrt(fc3_units)),
    }
    return params


def critic_reference(state, action, p):
    """Plain-JAX reference for correctness checking."""
    mean = jnp.mean(state, axis=0, keepdims=True)
    var = jnp.mean((state - mean) ** 2, axis=0, keepdims=True)
    s = (state - mean) * jax.lax.rsqrt(var + 1e-5) * p["bn_gamma"] + p["bn_beta"]
    xs = jax.nn.relu(s @ p["w1"] + p["b1"])
    x = jnp.concatenate([xs, action], axis=1)
    w2 = jnp.concatenate([p["w2s"], p["w2a"]], axis=0)
    x = jax.nn.relu(x @ w2 + p["b2"])
    x = jax.nn.relu(x @ p["w3"] + p["b3"])
    return x @ p["w4"].T + p["b4"]


if __name__ == "__main__":
    key = jax.random.PRNGKey(0)
    k_state, k_action, k_params = jax.random.split(key, 3)

    B, state_size, action_size = 8, 16, 4
    state = jax.random.normal(k_state, (B, state_size), jnp.float32)
    action = jax.random.uniform(k_action, (B, action_size), jnp.float32,
                                minval=-1.0, maxval=1.0)
    params = init_params(k_params, state_size, action_size)

    q = critic_forward(state, action, params)
    q = jax.block_until_ready(q)

    q_ref = critic_reference(state, action, params)
    assert q.shape == (B, 1)
    assert jnp.allclose(q, q_ref, atol=1e-4, rtol=1e-4), (q, q_ref)

    print("KERNEL_OK")
</pallas_src>

<mosaic_0001>
module attributes {stable_mosaic.version = 11 : i64} {
  func.func @critic_kernel(%arg0: memref<8x16xf32, #tpu.memory_space<vmem>>, %arg1: memref<8x4xf32, #tpu.memory_space<vmem>>, %arg2: memref<1x16xf32, #tpu.memory_space<vmem>>, %arg3: memref<1x16xf32, #tpu.memory_space<vmem>>, %arg4: memref<16x128xf32, #tpu.memory_space<vmem>>, %arg5: memref<1x128xf32, #tpu.memory_space<vmem>>, %arg6: memref<128x64xf32, #tpu.memory_space<vmem>>, %arg7: memref<4x64xf32, #tpu.memory_space<vmem>>, %arg8: memref<1x64xf32, #tpu.memory_space<vmem>>, %arg9: memref<64x32xf32, #tpu.memory_space<vmem>>, %arg10: memref<1x32xf32, #tpu.memory_space<vmem>>, %arg11: memref<1x32xf32, #tpu.memory_space<vmem>>, %arg12: memref<1x1xf32, #tpu.memory_space<vmem>>, %arg13: memref<1x8xf32, #tpu.memory_space<vmem>>) attributes {dimension_semantics = [], scalar_prefetch = 0 : i64, scratch_operands = 0 : i64, tpu.core_type = #tpu.core_type<tc>} {
    %c0 = arith.constant 0 : index
    %c0_0 = arith.constant 0 : index
    %0 = vector.load %arg0[%c0, %c0_0] : memref<8x16xf32, #tpu.memory_space<vmem>>, vector<8x16xf32>
    %cst = arith.constant dense<0.000000e+00> : vector<16xf32>
    %1 = vector.multi_reduction <add>, %0, %cst [0] : vector<8x16xf32> to vector<16xf32>
    %2 = vector.shape_cast %1 : vector<16xf32> to vector<1x16xf32>
    %cst_1 = arith.constant 1.250000e-01 : f32
    %3 = vector.broadcast %cst_1 : f32 to vector<1x16xf32>
    %4 = arith.mulf %2, %3 : vector<1x16xf32>
    %5 = arith.mulf %0, %0 : vector<8x16xf32>
    %cst_2 = arith.constant dense<0.000000e+00> : vector<16xf32>
    %6 = vector.multi_reduction <add>, %5, %cst_2 [0] : vector<8x16xf32> to vector<16xf32>
    %7 = vector.shape_cast %6 : vector<16xf32> to vector<1x16xf32>
    %cst_3 = arith.constant 1.250000e-01 : f32
    %8 = vector.broadcast %cst_3 : f32 to vector<1x16xf32>
    %9 = arith.mulf %7, %8 : vector<1x16xf32>
    %10 = arith.mulf %4, %4 : vector<1x16xf32>
    %11 = arith.subf %9, %10 : vector<1x16xf32>
    %c0_4 = arith.constant 0 : index
    %c0_5 = arith.constant 0 : index
    %12 = vector.load %arg2[%c0_4, %c0_5] : memref<1x16xf32, #tpu.memory_space<vmem>>, vector<1x16xf32>
    %cst_6 = arith.constant 9.99999974E-6 : f32
    %13 = vector.broadcast %cst_6 : f32 to vector<1x16xf32>
    %14 = arith.addf %11, %13 : vector<1x16xf32>
    %15 = math.rsqrt %14 : vector<1x16xf32>
    %16 = arith.mulf %12, %15 : vector<1x16xf32>
    %c0_7 = arith.constant 0 : index
    %c0_8 = arith.constant 0 : index
    %17 = vector.load %arg3[%c0_7, %c0_8] : memref<1x16xf32, #tpu.memory_space<vmem>>, vector<1x16xf32>
    %18 = arith.mulf %4, %16 : vector<1x16xf32>
    %19 = arith.subf %17, %18 : vector<1x16xf32>
    %20 = vector.broadcast %16 : vector<1x16xf32> to vector<8x16xf32>
    %21 = arith.mulf %0, %20 : vector<8x16xf32>
    %22 = vector.broadcast %19 : vector<1x16xf32> to vector<8x16xf32>
    %23 = arith.addf %21, %22 : vector<8x16xf32>
    %c0_9 = arith.constant 0 : index
    %c0_10 = arith.constant 0 : index
    %24 = vector.load %arg4[%c0_9, %c0_10] : memref<16x128xf32, #tpu.memory_space<vmem>>, vector<16x128xf32>
    %cst_11 = arith.constant dense<0.000000e+00> : vector<8x128xf32>
    %25 = tpu.matmul %23, %24, %cst_11 {dimension_numbers = #tpu.dot_dimension_numbers<[1], [0], [0], [1], [0, 0, 1, 1], [], []>} : vector<8x16xf32>, vector<16x128xf32>, vector<8x128xf32> -> vector<8x128xf32>
    %c0_12 = arith.constant 0 : index
    %c0_13 = arith.constant 0 : index
    %26 = vector.load %arg5[%c0_12, %c0_13] : memref<1x128xf32, #tpu.memory_space<vmem>>, vector<1x128xf32>
    %27 = vector.broadcast %26 : vector<1x128xf32> to vector<8x128xf32>
    %28 = arith.addf %25, %27 : vector<8x128xf32>
    %cst_14 = arith.constant 0.000000e+00 : f32
    %29 = vector.broadcast %cst_14 : f32 to vector<8x128xf32>
    %30 = arith.maximumf %28, %29 : vector<8x128xf32>
    %c0_15 = arith.constant 0 : index
    %c0_16 = arith.constant 0 : index
    %31 = vector.load %arg6[%c0_15, %c0_16] : memref<128x64xf32, #tpu.memory_space<vmem>>, vector<128x64xf32>
    %cst_17 = arith.constant dense<0.000000e+00> : vector<8x64xf32>
    %32 = tpu.matmul %30, %31, %cst_17 {dimension_numbers = #tpu.dot_dimension_numbers<[1], [0], [0], [1], [0, 0, 1, 1], [], []>} : vector<8x128xf32>, vector<128x64xf32>, vector<8x64xf32> -> vector<8x64xf32>
    %c0_18 = arith.constant 0 : index
    %c0_19 = arith.constant 0 : index
    %33 = vector.load %arg8[%c0_18, %c0_19] : memref<1x64xf32, #tpu.memory_space<vmem>>, vector<1x64xf32>
    %34 = vector.broadcast %33 : vector<1x64xf32> to vector<8x64xf32>
    %35 = arith.addf %32, %34 : vector<8x64xf32>
    %c0_20 = arith.constant 0 : index
    %c0_21 = arith.constant 0 : index
    %36 = vector.load %arg1[%c0_20, %c0_21] : memref<8x4xf32, #tpu.memory_space<vmem>>, vector<8x4xf32>
    %37 = vector.extract_strided_slice %36 {offsets = [0, 0], sizes = [8, 1], strides = [1, 1]} : vector<8x4xf32> to vector<8x1xf32>
    %c0_22 = arith.constant 0 : index
    %c0_23 = arith.constant 0 : index
    %38 = vector.load %arg7[%c0_22, %c0_23] : memref<4x64xf32, #tpu.memory_space<vmem>>, vector<1x64xf32>
    %39 = vector.broadcast %37 : vector<8x1xf32> to vector<8x64xf32>
    %40 = vector.broadcast %38 : vector<1x64xf32> to vector<8x64xf32>
    %41 = arith.mulf %39, %40 : vector<8x64xf32>
    %42 = arith.addf %35, %41 : vector<8x64xf32>
    %43 = vector.extract_strided_slice %36 {offsets = [0, 1], sizes = [8, 1], strides = [1, 1]} : vector<8x4xf32> to vector<8x1xf32>
    %c1 = arith.constant 1 : index
    %c0_24 = arith.constant 0 : index
    %44 = vector.load %arg7[%c1, %c0_24] : memref<4x64xf32, #tpu.memory_space<vmem>>, vector<1x64xf32>
    %45 = vector.broadcast %43 : vector<8x1xf32> to vector<8x64xf32>
    %46 = vector.broadcast %44 : vector<1x64xf32> to vector<8x64xf32>
    %47 = arith.mulf %45, %46 : vector<8x64xf32>
    %48 = arith.addf %42, %47 : vector<8x64xf32>
    %49 = vector.extract_strided_slice %36 {offsets = [0, 2], sizes = [8, 1], strides = [1, 1]} : vector<8x4xf32> to vector<8x1xf32>
    %c2 = arith.constant 2 : index
    %c0_25 = arith.constant 0 : index
    %50 = vector.load %arg7[%c2, %c0_25] : memref<4x64xf32, #tpu.memory_space<vmem>>, vector<1x64xf32>
    %51 = vector.broadcast %49 : vector<8x1xf32> to vector<8x64xf32>
    %52 = vector.broadcast %50 : vector<1x64xf32> to vector<8x64xf32>
    %53 = arith.mulf %51, %52 : vector<8x64xf32>
    %54 = arith.addf %48, %53 : vector<8x64xf32>
    %55 = vector.extract_strided_slice %36 {offsets = [0, 3], sizes = [8, 1], strides = [1, 1]} : vector<8x4xf32> to vector<8x1xf32>
    %c3 = arith.constant 3 : index
    %c0_26 = arith.constant 0 : index
    %56 = vector.load %arg7[%c3, %c0_26] : memref<4x64xf32, #tpu.memory_space<vmem>>, vector<1x64xf32>
    %57 = vector.broadcast %55 : vector<8x1xf32> to vector<8x64xf32>
    %58 = vector.broadcast %56 : vector<1x64xf32> to vector<8x64xf32>
    %59 = arith.mulf %57, %58 : vector<8x64xf32>
    %60 = arith.addf %54, %59 : vector<8x64xf32>
    %cst_27 = arith.constant 0.000000e+00 : f32
    %61 = vector.broadcast %cst_27 : f32 to vector<8x64xf32>
    %62 = arith.maximumf %60, %61 : vector<8x64xf32>
    %c0_28 = arith.constant 0 : index
    %c0_29 = arith.constant 0 : index
    %63 = vector.load %arg9[%c0_28, %c0_29] : memref<64x32xf32, #tpu.memory_space<vmem>>, vector<64x32xf32>
    %cst_30 = arith.constant dense<0.000000e+00> : vector<8x32xf32>
    %64 = tpu.matmul %62, %63, %cst_30 {dimension_numbers = #tpu.dot_dimension_numbers<[1], [0], [0], [1], [0, 0, 1, 1], [], []>} : vector<8x64xf32>, vector<64x32xf32>, vector<8x32xf32> -> vector<8x32xf32>
    %c0_31 = arith.constant 0 : index
    %c0_32 = arith.constant 0 : index
    %65 = vector.load %arg10[%c0_31, %c0_32] : memref<1x32xf32, #tpu.memory_space<vmem>>, vector<1x32xf32>
    %66 = vector.broadcast %65 : vector<1x32xf32> to vector<8x32xf32>
    %67 = arith.addf %64, %66 : vector<8x32xf32>
    %cst_33 = arith.constant 0.000000e+00 : f32
    %68 = vector.broadcast %cst_33 : f32 to vector<8x32xf32>
    %69 = arith.maximumf %67, %68 : vector<8x32xf32>
    %c0_34 = arith.constant 0 : index
    %c0_35 = arith.constant 0 : index
    %70 = vector.load %arg11[%c0_34, %c0_35] : memref<1x32xf32, #tpu.memory_space<vmem>>, vector<1x32xf32>
    %71 = vector.broadcast %70 : vector<1x32xf32> to vector<8x32xf32>
    %72 = arith.mulf %69, %71 : vector<8x32xf32>
    %cst_36 = arith.constant dense<0.000000e+00> : vector<8xf32>
    %73 = vector.multi_reduction <add>, %72, %cst_36 [1] : vector<8x32xf32> to vector<8xf32>
    %74 = vector.shape_cast %73 : vector<8xf32> to vector<8x1xf32>
    %75 = tpu.transpose %74, [1, 0] : vector<8x1xf32> -> vector<1x8xf32>
    %c0_37 = arith.constant 0 : index
    %c0_38 = arith.constant 0 : index
    %76 = vector.load %arg12[%c0_37, %c0_38] : memref<1x1xf32, #tpu.memory_space<vmem>>, vector<1x1xf32>
    %77 = vector.broadcast %76 : vector<1x1xf32> to vector<1x8xf32>
    %78 = arith.addf %75, %77 : vector<1x8xf32>
    %c0_39 = arith.constant 0 : index
    %c0_40 = arith.constant 0 : index
    %79 = vector.load %arg13[%c0_39, %c0_40] : memref<1x8xf32, #tpu.memory_space<vmem>>, vector<1x8xf32>
    tpu.vector_store %arg13[%c0_39, %c0_40], %78 {strides = array<i32>} : memref<1x8xf32, #tpu.memory_space<vmem>>, vector<1x8xf32>,
    return
  }
}

</mosaic_0001>

<llo_original>
// kernel: tpu_custom_call.1
$region0: #{tpu_custom_call.1}
  #allocation0 [shape = 'u32[]', space=smem, size = 0x4, offset = 0x4, fixed_abs, tag = 'smem constant byte address 0x4 - core index']
  #allocation1 [shape = 'u32[144,128]{1,0:T(1,128)}', space=vmem, size = 0x12000, scoped, tag = 'internal scratch']
  #allocation2 [shape = 'f32[1,1]{1,0:T(1,128)S(1)}', space=vmem, size = 0x200, scoped, tag = 'scoped memory for tpu_custom_call.1']
  %s0 = inlined_call_operand.vmem [shape: f32[8,16], index: 0, kind: input, shape index: {}]
  %s1 = inlined_call_operand.vmem [shape: f32[8,4], index: 1, kind: input, shape index: {}]
  %s2 = inlined_call_operand.vmem [shape: f32[1,16], index: 2, kind: input, shape index: {}]
  %s3 = inlined_call_operand.vmem [shape: f32[1,16], index: 3, kind: input, shape index: {}]
  %s4 = inlined_call_operand.vmem [shape: f32[16,128], index: 4, kind: input, shape index: {}]
  %s5 = inlined_call_operand.vmem [shape: f32[1,128], index: 5, kind: input, shape index: {}]
  %s6 = inlined_call_operand.vmem [shape: f32[128,64], index: 6, kind: input, shape index: {}]
  %s7 = inlined_call_operand.vmem [shape: f32[4,64], index: 7, kind: input, shape index: {}]
  %s8 = inlined_call_operand.vmem [shape: f32[1,64], index: 8, kind: input, shape index: {}]
  %s9 = inlined_call_operand.vmem [shape: f32[64,32], index: 9, kind: input, shape index: {}]
  %s10 = inlined_call_operand.vmem [shape: f32[1,32], index: 10, kind: input, shape index: {}]
  %s11 = inlined_call_operand.vmem [shape: f32[1,32], index: 11, kind: input, shape index: {}]
  %s12 = inlined_call_operand.<no memory space> [shape: f32[1,1], index: 12, kind: input, shape index: {}]
  %s13 = inlined_call_operand.hbm [shape: f32[1,8], index: 13, kind: output, shape index: {}]
  %s14 = sld [smem:[#allocation0]]
  $region62: #{tpu_custom_call.1} parent=0
    _
  %s16 = ssub.s32 1, %s14
  %s17 = scalar_select 0, %s16, %s14
  %v18 = vstv %s12
  %19 = vst [vmem:[#allocation2] sm:$0x1] %v18
  $region1: #{tpu_custom_call.1} parent=0
    #allocation3 [shape = 'u8[512]{0}', space=vmem, size = 0x400, scoped, tag = 'output window, operand 0, single buffered']
    #allocation4 [shape = 's32[1]{0}', space=sflag, size = 0x4, scoped, tag = 'scoped memory for tpu_custom_call.1']
    %20 = vsyncpa [#allocation4], 0
    // Predicated region
    $region2: #{tpu_custom_call.1} parent=1 // pred_check
      _
    $region3: #{tpu_custom_call.1} parent=1 // pred_check_branch
      %22 = sbr.rel (0) target = $region5
    $region4: #{tpu_custom_call.1} parent=1 // pred_region
      _
    $region5: #{tpu_custom_call.1} parent=1 // pred_fallthru
      _
    // Predicated region
    $region6: #{tpu_custom_call.1} parent=1 // pred_check
      _
    $region7: #{tpu_custom_call.1} parent=1 // pred_check_branch
      %24 = sbr.rel (0) target = $region9
    $region8: #{tpu_custom_call.1} parent=1 // pred_region
      _
    $region9: #{tpu_custom_call.1} parent=1 // pred_fallthru
      _
    // Predicated region
    $region10: #{tpu_custom_call.1} parent=1 // pred_check
      _
    $region11: #{tpu_custom_call.1} parent=1 // pred_check_branch
      %26 = sbr.rel (0) target = $region13
    $region12: #{tpu_custom_call.1} parent=1 // pred_region
      _
    $region13: #{tpu_custom_call.1} parent=1 // pred_fallthru
      _
    // Predicated region
    $region14: #{tpu_custom_call.1} parent=1 // pred_check
      _
    $region15: #{tpu_custom_call.1} parent=1 // pred_check_branch
      %28 = sbr.rel (0) target = $region17
    $region16: #{tpu_custom_call.1} parent=1 // pred_region
      _
    $region17: #{tpu_custom_call.1} parent=1 // pred_fallthru
      _
    // Predicated region
    $region18: #{tpu_custom_call.1} parent=1 // pred_check
      _
    $region19: #{tpu_custom_call.1} parent=1 // pred_check_branch
      %30 = sbr.rel (0) target = $region21
    $region20: #{tpu_custom_call.1} parent=1 // pred_region
      _
    $region21: #{tpu_custom_call.1} parent=1 // pred_fallthru
      _
    // Predicated region
    $region22: #{tpu_custom_call.1} parent=1 // pred_check
      _
    $region23: #{tpu_custom_call.1} parent=1 // pred_check_branch
      %32 = sbr.rel (0) target = $region25
    $region24: #{tpu_custom_call.1} parent=1 // pred_region
      _
    $region25: #{tpu_custom_call.1} parent=1 // pred_fallthru
      _
    // Predicated region
    $region26: #{tpu_custom_call.1} parent=1 // pred_check
      _
    $region27: #{tpu_custom_call.1} parent=1 // pred_check_branch
      %34 = sbr.rel (0) target = $region29
    $region28: #{tpu_custom_call.1} parent=1 // pred_region
      _
    $region29: #{tpu_custom_call.1} parent=1 // pred_fallthru
      _
    // Predicated region
    $region30: #{tpu_custom_call.1} parent=1 // pred_check
      _
    $region31: #{tpu_custom_call.1} parent=1 // pred_check_branch
      %36 = sbr.rel (0) target = $region33
    $region32: #{tpu_custom_call.1} parent=1 // pred_region
      _
    $region33: #{tpu_custom_call.1} parent=1 // pred_fallthru
      _
    // Predicated region
    $region34: #{tpu_custom_call.1} parent=1 // pred_check
      _
    $region35: #{tpu_custom_call.1} parent=1 // pred_check_branch
      %38 = sbr.rel (0) target = $region37
    $region36: #{tpu_custom_call.1} parent=1 // pred_region
      _
    $region37: #{tpu_custom_call.1} parent=1 // pred_fallthru
      _
    // Predicated region
    $region38: #{tpu_custom_call.1} parent=1 // pred_check
      _
    $region39: #{tpu_custom_call.1} parent=1 // pred_check_branch
      %40 = sbr.rel (0) target = $region41
    $region40: #{tpu_custom_call.1} parent=1 // pred_region
      _
    $region41: #{tpu_custom_call.1} parent=1 // pred_fallthru
      _
    // Predicated region
    $region42: #{tpu_custom_call.1} parent=1 // pred_check
      _
    $region43: #{tpu_custom_call.1} parent=1 // pred_check_branch
      %42 = sbr.rel (0) target = $region45
    $region44: #{tpu_custom_call.1} parent=1 // pred_region
      _
    $region45: #{tpu_custom_call.1} parent=1 // pred_fallthru
      _
    // Predicated region
    $region46: #{tpu_custom_call.1} parent=1 // pred_check
      _
    $region47: #{tpu_custom_call.1} parent=1 // pred_check_branch
      %44 = sbr.rel (0) target = $region49
    $region48: #{tpu_custom_call.1} parent=1 // pred_region
      _
    $region49: #{tpu_custom_call.1} parent=1 // pred_fallthru
      _
    // Predicated region
    $region50: #{tpu_custom_call.1} parent=1 // pred_check
      _
    $region51: #{tpu_custom_call.1} parent=1 // pred_check_branch
      %46 = sbr.rel (0) target = $region53
    $region52: #{tpu_custom_call.1} parent=1 // pred_region
      _
    $region53: #{tpu_custom_call.1} parent=1 // pred_fallthru
      _
    %v47 = vld [vmem:[%s0] sm:$0xff]
    %vm48 = vcmask 130048
    %v49 = vsel %vm48, %v47, 0.0
    %v50 = vrot.slane %v49, 4
    %v51 = vadd.f32 %v49, %v50
    %v52 = vrot.slane %v51, 2
    %v53 = vadd.f32 %v51, %v52
    %v54 = vrot.slane %v53, 1
    %v55 = vadd.f32 %v53, %v54
    %v56 = vmul.f32 %v55, 0.125
    %v57 = vmul.f32 %v47, %v47
    %v58 = vsel %vm48, %v57, 0.0
    %v59 = vrot.slane %v58, 4
    %v60 = vadd.f32 %v58, %v59
    %v61 = vrot.slane %v60, 2
    %v62 = vadd.f32 %v60, %v61
    %v63 = vrot.slane %v62, 1
    %v64 = vadd.f32 %v62, %v63
    %v65 = vmul.f32 %v64, 0.125
    %v66 = vmul.f32 %v56, %v56
    %v67 = vsub.f32 %v65, %v66
    %v68 = vld [vmem:[%s2] sm:$0x1]
    %v69 = vadd.f32 %v67, 1e-05
    %v70 = vrsqrt.pop %v69
    %v71 = vmul.f32 %v68, %v70
    %v72 = vld [vmem:[%s3] sm:$0x1]
    %v73 = vmul.f32 %v56, %v71
    %v74 = vsub.f32 %v72, %v73
    %v76 = vlaneseq
    %v77 = vshrl.u32 %v76, 7
    %v78 = vsub.s32 0, %v77
    %v79 = vrot.slane %v71, %v78
    %v81 = vmul.f32 %v47, %v79
    %v83 = vlaneseq
    %v84 = vshrl.u32 %v83, 7
    %v85 = vsub.s32 0, %v84
    %v86 = vrot.slane %v74, %v85
    %v88 = vadd.f32 %v81, %v86
    %v89 = vld [vmem:[%s4] sm:$0xff]
    %v90 = vld [vmem:[%s4 + $0x8] sm:$0xff]
    %v91 = vld [vmem:[%s5] sm:$0x1]
    %v93 = vlaneseq
    %v94 = vshrl.u32 %v93, 7
    %v95 = vsub.s32 0, %v94
    %v96 = vrot.slane %v91, %v95
    %v99 = vsel %vm48, %v88, 0
    %101 = vmatprep.subr.mxu0 0.0
    %102 = vmatpush1.msra.mxu0 %v89
    %103 = vmatprep.subr.mxu0 0.0
    %104 = vmatpush1.msra.mxu0 %v90
    %105 = vmatprep.subr.mxu0 0.0
    %106 = vmatpush1.msra.mxu0 0.0
    %107 = vmatprep.subr.mxu0 0.0
    %108 = vmatpush1.msra.mxu0 0.0
    %109 = vmatprep.subr.mxu0 0.0
    %110 = vmatpush1.msra.mxu0 0.0
    %111 = vmatprep.subr.mxu0 0.0
    %112 = vmatpush1.msra.mxu0 0.0
    %113 = vmatprep.subr.mxu0 0.0
    %114 = vmatpush1.msra.mxu0 0.0
    %115 = vmatprep.subr.mxu0 0.0
    %116 = vmatpush1.msra.mxu0 0.0
    %117 = vmatprep.subr.mxu0 0.0
    %118 = vmatpush1.msra.mxu0 0.0
    %119 = vmatprep.subr.mxu0 0.0
    %120 = vmatpush1.msra.mxu0 0.0
    %121 = vmatprep.subr.mxu0 0.0
    %122 = vmatpush1.msra.mxu0 0.0
    %123 = vmatprep.subr.mxu0 0.0
    %124 = vmatpush1.msra.mxu0 0.0
    %125 = vmatprep.subr.mxu0 0.0
    %126 = vmatpush1.msra.mxu0 0.0
    %127 = vmatprep.subr.mxu0 0.0
    %128 = vmatpush1.msra.mxu0 0.0
    %129 = vmatprep.subr.mxu0 0.0
    %130 = vmatpush1.msra.mxu0 0.0
    %131 = vmatprep.subr.mxu0 0.0
    %132 = vmatpush1.msra.mxu0 0.0
    %133 = vmatprep.subr.mxu0 0.0
    %134 = vmatpush1.msra.mxu0 0.0
    %135 = vmatprep.subr.mxu0 0.0
    %136 = vmatpush1.msra.mxu0 0.0
    %137 = vmatprep.subr.mxu0 0.0
    %138 = vmatpush1.msra.mxu0 0.0
    %139 = vmatprep.subr.mxu0 0.0
    %140 = vmatpush1.msra.mxu0 0.0
    %141 = vmatprep.subr.mxu0 0.0
    %142 = vmatpush1.msra.mxu0 0.0
    %143 = vmatprep.subr.mxu0 0.0
    %144 = vmatpush1.msra.mxu0 0.0
    %145 = vmatprep.subr.mxu0 0.0
    %146 = vmatpush1.msra.mxu0 0.0
    %147 = vmatprep.subr.mxu0 0.0
    %148 = vmatpush1.msra.mxu0 0.0
    %149 = vmatprep.subr.mxu0 0.0
    %150 = vmatpush1.msra.mxu0 0.0
    %151 = vmatprep.subr.mxu0 0.0
    %152 = vmatpush1.msra.mxu0 0.0
    %153 = vmatprep.subr.mxu0 0.0
    %154 = vmatpush1.msra.mxu0 0.0
    %155 = vmatprep.subr.mxu0 0.0
    %156 = vmatpush1.msra.mxu0 0.0
    %157 = vmatprep.subr.mxu0 0.0
    %158 = vmatpush1.msra.mxu0 0.0
    %159 = vmatprep.subr.mxu0 0.0
    %160 = vmatpush1.msra.mxu0 0.0
    %161 = vmatprep.subr.mxu0 0.0
    %162 = vmatpush1.msra.mxu0 0.0
    %163 = vmatprep.subr.mxu0 0.0
    %164 = vmatpush1.msra.mxu0 0.0
    %165 = vmatprep.mubr.f32.mxu0 0.0
    %166 = vmatmul.mubr.f32.gmra.mrb[0].mxu0 %v99
    %v167 = vpop.f32.mrb[0].mxu0
    %v168 = vadd.f32 %v96, %v167
    %v169 = vpop.f32.mrb[0].mxu0
    %170 = vdwg.mxu0
    %v171 = vmax.f32 %v168, 0.0
    %v172 = vld [vmem:[%s6] sm:$0xff]
    %v173 = vld [vmem:[%s6 + $0x8] sm:$0xff]
    %v174 = vld [vmem:[%s6 + $0x10] sm:$0xff]
    %v175 = vld [vmem:[%s6 + $0x18] sm:$0xff]
    %v176 = vld [vmem:[%s6 + $0x20] sm:$0xff]
    %v177 = vld [vmem:[%s6 + $0x28] sm:$0xff]
    %v178 = vld [vmem:[%s6 + $0x30] sm:$0xff]
    %v179 = vld [vmem:[%s6 + $0x38] sm:$0xff]
    %v180 = vld [vmem:[%s6 + $0x40] sm:$0xff]
    %v181 = vld [vmem:[%s6 + $0x48] sm:$0xff]
    %v182 = vld [vmem:[%s6 + $0x50] sm:$0xff]
    %v183 = vld [vmem:[%s6 + $0x58] sm:$0xff]
    %v184 = vld [vmem:[%s6 + $0x60] sm:$0xff]
    %v185 = vld [vmem:[%s6 + $0x68] sm:$0xff]
    %v186 = vld [vmem:[%s6 + $0x70] sm:$0xff]
    %v187 = vld [vmem:[%s6 + $0x78] sm:$0xff]
    %v188 = vld [vmem:[%s8] sm:$0x1]
    %v190 = vlaneseq
    %v191 = vshrl.u32 %v190, 7
    %v192 = vsub.s32 0, %v191
    %v193 = vrot.slane %v188, %v192
    %195 = vmatprep.subr.mxu0 0.0
    %196 = vmatpush1.msra.mxu0 %v172
    %197 = vmatprep.subr.mxu0 0.0
    %198 = vmatpush1.msra.mxu0 %v173
    %199 = vmatprep.subr.mxu0 0.0
    %200 = vmatpush1.msra.mxu0 %v174
    %201 = vmatprep.subr.mxu0 0.0
    %202 = vmatpush1.msra.mxu0 %v175
    %203 = vmatprep.subr.mxu0 0.0
    %204 = vmatpush1.msra.mxu0 %v176
    %205 = vmatprep.subr.mxu0 0.0
    %206 = vmatpush1.msra.mxu0 %v177
    %207 = vmatprep.subr.mxu0 0.0
    %208 = vmatpush1.msra.mxu0 %v178
    %209 = vmatprep.subr.mxu0 0.0
    %210 = vmatpush1.msra.mxu0 %v179
    %211 = vmatprep.subr.mxu0 0.0
    %212 = vmatpush1.msra.mxu0 %v180
    %213 = vmatprep.subr.mxu0 0.0
    %214 = vmatpush1.msra.mxu0 %v181
    %215 = vmatprep.subr.mxu0 0.0
    %216 = vmatpush1.msra.mxu0 %v182
    %217 = vmatprep.subr.mxu0 0.0
    %218 = vmatpush1.msra.mxu0 %v183
    %219 = vmatprep.subr.mxu0 0.0
    %220 = vmatpush1.msra.mxu0 %v184
    %221 = vmatprep.subr.mxu0 0.0
    %222 = vmatpush1.msra.mxu0 %v185
    %223 = vmatprep.subr.mxu0 0.0
    %224 = vmatpush1.msra.mxu0 %v186
    %225 = vmatprep.subr.mxu0 0.0
    %226 = vmatpush1.msra.mxu0 %v187
    %227 = vmatprep.subr.mxu0 0.0
    %228 = vmatpush1.msra.mxu0 0.0
    %229 = vmatprep.subr.mxu0 0.0
    %230 = vmatpush1.msra.mxu0 0.0
    %231 = vmatprep.subr.mxu0 0.0
    %232 = vmatpush1.msra.mxu0 0.0
    %233 = vmatprep.subr.mxu0 0.0
    %234 = vmatpush1.msra.mxu0 0.0
    %235 = vmatprep.subr.mxu0 0.0
    %236 = vmatpush1.msra.mxu0 0.0
    %237 = vmatprep.subr.mxu0 0.0
    %238 = vmatpush1.msra.mxu0 0.0
    %239 = vmatprep.subr.mxu0 0.0
    %240 = vmatpush1.msra.mxu0 0.0
    %241 = vmatprep.subr.mxu0 0.0
    %242 = vmatpush1.msra.mxu0 0.0
    %243 = vmatprep.subr.mxu0 0.0
    %244 = vmatpush1.msra.mxu0 0.0
    %245 = vmatprep.subr.mxu0 0.0
    %246 = vmatpush1.msra.mxu0 0.0
    %247 = vmatprep.subr.mxu0 0.0
    %248 = vmatpush1.msra.mxu0 0.0
    %249 = vmatprep.subr.mxu0 0.0
    %250 = vmatpush1.msra.mxu0 0.0
    %251 = vmatprep.subr.mxu0 0.0
    %252 = vmatpush1.msra.mxu0 0.0
    %253 = vmatprep.subr.mxu0 0.0
    %254 = vmatpush1.msra.mxu0 0.0
    %255 = vmatprep.subr.mxu0 0.0
    %256 = vmatpush1.msra.mxu0 0.0
    %257 = vmatprep.subr.mxu0 0.0
    %258 = vmatpush1.msra.mxu0 0.0
    %259 = vmatprep.mubr.f32.mxu0 0.0
    %260 = vmatmul.mubr.f32.gmra.mrb[0].mxu0 %v171
    %v261 = vpop.f32.mrb[0].mxu0
    %v262 = vadd.f32 %v193, %v261
    %v263 = vpop.f32.mrb[0].mxu0
    %264 = vdwg.mxu0
    %v265 = vld [vmem:[%s1] sm:$0xff]
    %v266 = vld [vmem:[%s7] sm:$0x1]
    %268 = vset.pattern.permute.xlu0 0
    %269 = vperm.xlu0 %268, %v265
    %v270 = vpop.permute.xlu0 %269
    %v272 = vlaneseq
    %v273 = vshrl.u32 %v272, 7
    %v274 = vsub.s32 0, %v273
    %v275 = vrot.slane %v266, %v274
    %v276 = vmul.f32 %v270, %v275
    %v277 = vadd.f32 %v262, %v276
    %v278 = vld [vmem:[%s7 + $0x1] sm:$0x1]
    %279 = vset.pattern.permute.xlu0 1
    %280 = vperm.xlu0 %279, %v265
    %v281 = vpop.permute.xlu0 %280
    %v283 = vlaneseq
    %v284 = vshrl.u32 %v283, 7
    %v285 = vsub.s32 0, %v284
    %v286 = vrot.slane %v278, %v285
    %v287 = vmul.f32 %v281, %v286
    %v288 = vadd.f32 %v277, %v287
    %v289 = vld [vmem:[%s7 + $0x2] sm:$0x1]
    %290 = vset.pattern.permute.xlu0 2
    %291 = vperm.xlu0 %290, %v265
    %v292 = vpop.permute.xlu0 %291
    %v294 = vlaneseq
    %v295 = vshrl.u32 %v294, 7
    %v296 = vsub.s32 0, %v295
    %v297 = vrot.slane %v289, %v296
    %v298 = vmul.f32 %v292, %v297
    %v299 = vadd.f32 %v288, %v298
    %v300 = vld [vmem:[%s7 + $0x3] sm:$0x1]
    %301 = vset.pattern.permute.xlu0 3
    %302 = vperm.xlu0 %301, %v265
    %v303 = vpop.permute.xlu0 %302
    %v305 = vlaneseq
    %v306 = vshrl.u32 %v305, 7
    %v307 = vsub.s32 0, %v306
    %v308 = vrot.slane %v300, %v307
    %v309 = vmul.f32 %v303, %v308
    %v310 = vadd.f32 %v299, %v309
    %v311 = vmax.f32 %v310, 0.0
    %v312 = vld [vmem:[%s9] sm:$0xff]
    %v313 = vld [vmem:[%s9 + $0x8] sm:$0xff]
    %v314 = vld [vmem:[%s9 + $0x10] sm:$0xff]
    %v315 = vld [vmem:[%s9 + $0x18] sm:$0xff]
    %v316 = vld [vmem:[%s9 + $0x20] sm:$0xff]
    %v317 = vld [vmem:[%s9 + $0x28] sm:$0xff]
    %v318 = vld [vmem:[%s9 + $0x30] sm:$0xff]
    %v319 = vld [vmem:[%s9 + $0x38] sm:$0xff]
    %v320 = vld [vmem:[%s10] sm:$0x1]
    %v322 = vlaneseq
    %v323 = vshrl.u32 %v322, 7
    %v324 = vsub.s32 0, %v323
    %v325 = vrot.slane %v320, %v324
    %vm327 = vcmask 523264
    %v329 = vsel %vm327, %v311, 0
    %331 = vmatprep.subr.mxu0 0.0
    %332 = vmatpush1.msra.mxu0 %v312
    %333 = vmatprep.subr.mxu0 0.0
    %334 = vmatpush1.msra.mxu0 %v313
    %335 = vmatprep.subr.mxu0 0.0
    %336 = vmatpush1.msra.mxu0 %v314
    %337 = vmatprep.subr.mxu0 0.0
    %338 = vmatpush1.msra.mxu0 %v315
    %339 = vmatprep.subr.mxu0 0.0
    %340 = vmatpush1.msra.mxu0 %v316
    %341 = vmatprep.subr.mxu0 0.0
    %342 = vmatpush1.msra.mxu0 %v317
    %343 = vmatprep.subr.mxu0 0.0
    %344 = vmatpush1.msra.mxu0 %v318
    %345 = vmatprep.subr.mxu0 0.0
    %346 = vmatpush1.msra.mxu0 %v319
    %347 = vmatprep.subr.mxu0 0.0
    %348 = vmatpush1.msra.mxu0 0.0
    %349 = vmatprep.subr.mxu0 0.0
    %350 = vmatpush1.msra.mxu0 0.0
    %351 = vmatprep.subr.mxu0 0.0
    %352 = vmatpush1.msra.mxu0 0.0
    %353 = vmatprep.subr.mxu0 0.0
    %354 = vmatpush1.msra.mxu0 0.0
    %355 = vmatprep.subr.mxu0 0.0
    %356 = vmatpush1.msra.mxu0 0.0
    %357 = vmatprep.subr.mxu0 0.0
    %358 = vmatpush1.msra.mxu0 0.0
    %359 = vmatprep.subr.mxu0 0.0
    %360 = vmatpush1.msra.mxu0 0.0
    %361 = vmatprep.subr.mxu0 0.0
    %362 = vmatpush1.msra.mxu0 0.0
    %363 = vmatprep.subr.mxu0 0.0
    %364 = vmatpush1.msra.mxu0 0.0
    %365 = vmatprep.subr.mxu0 0.0
    %366 = vmatpush1.msra.mxu0 0.0
    %367 = vmatprep.subr.mxu0 0.0
    %368 = vmatpush1.msra.mxu0 0.0
    %369 = vmatprep.subr.mxu0 0.0
    %370 = vmatpush1.msra.mxu0 0.0
    %371 = vmatprep.subr.mxu0 0.0
    %372 = vmatpush1.msra.mxu0 0.0
    %373 = vmatprep.subr.mxu0 0.0
    %374 = vmatpush1.msra.mxu0 0.0
    %375 = vmatprep.subr.mxu0 0.0
    %376 = vmatpush1.msra.mxu0 0.0
    %377 = vmatprep.subr.mxu0 0.0
    %378 = vmatpush1.msra.mxu0 0.0
    %379 = vmatprep.subr.mxu0 0.0
    %380 = vmatpush1.msra.mxu0 0.0
    %381 = vmatprep.subr.mxu0 0.0
    %382 = vmatpush1.msra.mxu0 0.0
    %383 = vmatprep.subr.mxu0 0.0
    %384 = vmatpush1.msra.mxu0 0.0
    %385 = vmatprep.subr.mxu0 0.0
    %386 = vmatpush1.msra.mxu0 0.0
    %387 = vmatprep.subr.mxu0 0.0
    %388 = vmatpush1.msra.mxu0 0.0
    %389 = vmatprep.subr.mxu0 0.0
    %390 = vmatpush1.msra.mxu0 0.0
    %391 = vmatprep.subr.mxu0 0.0
    %392 = vmatpush1.msra.mxu0 0.0
    %393 = vmatprep.subr.mxu0 0.0
    %394 = vmatpush1.msra.mxu0 0.0
    %395 = vmatprep.mubr.f32.mxu0 0.0
    %396 = vmatmul.mubr.f32.gmra.mrb[0].mxu0 %v329
    %v397 = vpop.f32.mrb[0].mxu0
    %v398 = vadd.f32 %v325, %v397
    %v399 = vpop.f32.mrb[0].mxu0
    %400 = vdwg.mxu0
    %v401 = vmax.f32 %v398, 0.0
    %v402 = vld [vmem:[%s11] sm:$0x1]
    %v404 = vlaneseq
    %v405 = vshrl.u32 %v404, 7
    %v406 = vsub.s32 0, %v405
    %v407 = vrot.slane %v402, %v406
    %v409 = vmul.f32 %v401, %v407
    %vm410 = vcmask 261120
    %v411 = vsel %vm410, %v409, 0.0
    %412 = vadd.xlane.f32.xlu0 %v411
    %v413 = vpop.xlane.xlu0 %412
    %414 = vxpose.xlu0.b32.start [1/16] %v413, 128
    %415 = vxpose.xlu0.b32.cont [2/16] 0.0, 128
    %416 = vxpose.xlu0.b32.cont [3/16] 0.0, 128
    %417 = vxpose.xlu0.b32.cont [4/16] 0.0, 128
    %418 = vxpose.xlu0.b32.cont [5/16] 0.0, 128
    %419 = vxpose.xlu0.b32.cont [6/16] 0.0, 128
    %420 = vxpose.xlu0.b32.cont [7/16] 0.0, 128
    %421 = vxpose.xlu0.b32.cont [8/16] 0.0, 128
    %422 = vxpose.xlu0.b32.cont [9/16] 0.0, 128
    %423 = vxpose.xlu0.b32.cont [10/16] 0.0, 128
    %424 = vxpose.xlu0.b32.cont [11/16] 0.0, 128
    %425 = vxpose.xlu0.b32.cont [12/16] 0.0, 128
    %426 = vxpose.xlu0.b32.cont [13/16] 0.0, 128
    %427 = vxpose.xlu0.b32.cont [14/16] 0.0, 128
    %428 = vxpose.xlu0.b32.cont [15/16] 0.0, 128
    %429 = vxpose.xlu0.b32.end [16/16] 0.0, 128
    %v430 = vpop.trf.xlu0
    %v431 = vpop.trf.xlu0
    %v432 = vpop.trf.xlu0
    %v433 = vpop.trf.xlu0
    %v434 = vpop.trf.xlu0
    %v435 = vpop.trf.xlu0
    %v436 = vpop.trf.xlu0
    %v437 = vpop.trf.xlu0
    %v438 = vpop.trf.xlu0
    %v439 = vpop.trf.xlu0
    %v440 = vpop.trf.xlu0
    %v441 = vpop.trf.xlu0
    %v442 = vpop.trf.xlu0
    %v443 = vpop.trf.xlu0
    %v444 = vpop.trf.xlu0
    %v445 = vpop.trf.xlu0
    %v446 = vld [vmem:[#allocation2] sm:$0x1]
    %448 = vset.pattern.permute.xlu0 0
    %449 = vperm.xlu0 %448, %v446
    %v450 = vpop.permute.xlu0 %449
    %v452 = vlaneseq
    %v453 = vshrl.u32 %v452, 7
    %v454 = vsub.s32 0, %v453
    %v455 = vrot.slane %v450, %v454
    %v456 = vadd.f32 %v430, %v455
    %vm457 = vcmask 57344
    %458 = vst.msk [vmem:[#allocation3] sm:$0x1] %vm457, %v456
    // Predicated region
    $region54: #{tpu_custom_call.1} parent=1 // pred_check
      _
    $region55: #{tpu_custom_call.1} parent=1 // pred_check_branch
      %460 = sbr.rel (0) target = $region57
    $region56: #{tpu_custom_call.1} parent=1 // pred_region
      %s462 = ssub.s32 16, 16
      %463 = vsyncadd [#allocation4], %s462
      %s465 = sshll.u32 [#allocation3], 4
      %s466 = int_to_ptr.vmem [resolvable:$true] %s465
      %468 = dma.vmem_to_hbm [thread:$0]  %s466, 16, %s13, [#allocation4]
    $region57: #{tpu_custom_call.1} parent=1 // pred_fallthru
      _
    // Predicated region
    $region58: #{tpu_custom_call.1} parent=1 // pred_check
      _
    $region59: #{tpu_custom_call.1} parent=1 // pred_check_branch
      %470 = sbr.rel (0) target = $region61
    $region60: #{tpu_custom_call.1} parent=1 // pred_region
      %471 = dma.done [#allocation4], 16
    $region61: #{tpu_custom_call.1} parent=1 // pred_fallthru
      _
    %472 = vsyncpa [#allocation4], 1

</llo_original>
